<compile_context>
chip_gen: v7x
topology: tpu7x:2x2x1
jax: 0.10.0
libtpu: 0.0.40
codegen_flags: <defaults>
</compile_context>

<pallas_src>
import math

import jax
import jax.numpy as jnp
from jax.experimental import pallas as pl
from jax.experimental.pallas import tpu as pltpu

_LANES = 128
_TARGET_BLOCK_BYTES = 4 << 20      # ~4 MiB blocks for the pipelined fallback
_VMEM_LIMIT_BYTES = 48 << 20       # explicit scoped-VMEM limit (safe on v5e/v6e/v7x)


# ----------------------------------------------------------------------------
# Module-faithful path: Identity.forward is a no-op.
# ----------------------------------------------------------------------------
def identity(x: jax.Array) -> jax.Array:
    """Identity.forward(x) -> x. No compute, no copy, no HBM traffic."""
    return x


# ----------------------------------------------------------------------------
# Pallas-backed explicit copy: one direct HBM -> HBM DMA.
# ----------------------------------------------------------------------------
def _dma_identity_kernel(x_hbm_ref, o_hbm_ref, sem):
    copy = pltpu.make_async_copy(x_hbm_ref, o_hbm_ref, sem)
    copy.start()
    copy.wait()


def identity_copy(x: jax.Array) -> jax.Array:
    """Identity as an explicit copy kernel (direct HBM->HBM DMA)."""
    if x.ndim == 0 or x.size == 0:
        # Nothing a DMA needs to do; identity semantics are preserved.
        return x
    return pl.pallas_call(
        _dma_identity_kernel,
        out_shape=jax.ShapeDtypeStruct(x.shape, x.dtype),
        in_specs=[pl.BlockSpec(memory_space=pl.ANY)],
        out_specs=pl.BlockSpec(memory_space=pl.ANY),
        scratch_shapes=[pltpu.SemaphoreType.DMA(())],
    )(x)


# ----------------------------------------------------------------------------
# Fallback: VMEM-pipelined copy (kept per review; not the default path).
# ----------------------------------------------------------------------------
def _copy_kernel(x_ref, o_ref):
    o_ref[...] = x_ref[...]


def _round_up(a: int, b: int) -> int:
    return -(-a // b) * b


def _min_sublanes(dtype) -> int:
    """Packed sublane multiple so stores stay full-width (unmasked vst)."""
    itemsize = jnp.dtype(dtype).itemsize
    if itemsize >= 4:
        return 8
    if itemsize == 2:
        return 16
    # 1-byte and sub-byte (int4/fp4) dtypes pack at least 4 rows per sublane.
    return 32


def identity_copy_pipelined(x: jax.Array) -> jax.Array:
    """Pipelined VMEM-staged copy fallback (lane-dense 2D slab, ~4 MiB blocks)."""
    orig_shape, dtype = x.shape, x.dtype
    total = math.prod(orig_shape) if orig_shape else 1
    if x.ndim == 0 or total == 0:
        return x

    itemsize = jnp.dtype(dtype).itemsize
    min_sub = _min_sublanes(dtype)

    # Pick the widest lane-dense column count that divides `total` exactly;
    # only pad (by < 128 elements) when total is not a multiple of 128.
    cols = None
    for c in (4096, 2048, 1024, 512, 256, 128):
        if total % c == 0:
            cols = c
            break
    flat = x.reshape(-1)
    if cols is None:
        cols = _LANES
        pad = _round_up(total, _LANES) - total
        flat = jnp.pad(flat, (0, pad))
    else:
        pad = 0

    rows = flat.shape[0] // cols
    x2 = flat.reshape(rows, cols)

    # Row-block sized for ~4 MiB (multiple of the packed sublane count).
    br = max(min_sub,
             (_TARGET_BLOCK_BYTES // max(cols * itemsize, 1)) // min_sub * min_sub)
    if rows <= br:
        br = rows  # single block == full dims (always legal)

    out2 = pl.pallas_call(
        _copy_kernel,
        out_shape=jax.ShapeDtypeStruct((rows, cols), dtype),
        grid=(pl.cdiv(rows, br),),  # ragged final block handled by Pallas
        in_specs=[pl.BlockSpec((br, cols), lambda i: (i, 0))],
        out_specs=pl.BlockSpec((br, cols), lambda i: (i, 0)),
        compiler_params=pltpu.CompilerParams(
            dimension_semantics=("parallel",),
            vmem_limit_bytes=_VMEM_LIMIT_BYTES,
        ),
    )(x2)

    out = out2.reshape(-1)
    if pad:
        out = out[:total]
    return out.reshape(orig_shape)


# ----------------------------------------------------------------------------
# Self-test
# ----------------------------------------------------------------------------
if __name__ == "__main__":
    key = jax.random.PRNGKey(0)

    # NCHW-style small input consistent with a generic feature map.
    x = jax.random.normal(key, (2, 4, 16, 16), dtype=jnp.float32)

    # 1) Module-faithful no-op path.
    y0 = identity(x)
    assert y0.shape == x.shape and y0.dtype == x.dtype
    assert bool(jnp.all(y0 == x))

    # 2) Direct HBM->HBM DMA copy kernel.
    y1 = jax.block_until_ready(identity_copy(x))
    assert y1.shape == x.shape and y1.dtype == x.dtype
    assert bool(jnp.all(y1 == x))

    # Awkward (non-128-multiple) shape through the DMA path — no padding needed.
    x_odd = jax.random.normal(jax.random.PRNGKey(0), (3, 5, 7), dtype=jnp.float32)
    y_odd = jax.block_until_ready(identity_copy(x_odd))
    assert y_odd.shape == x_odd.shape and y_odd.dtype == x_odd.dtype
    assert bool(jnp.all(y_odd == x_odd))

    # bf16 through the DMA path.
    x_bf16 = jax.random.normal(jax.random.PRNGKey(0), (2, 8, 32), dtype=jnp.bfloat16)
    y_bf16 = jax.block_until_ready(identity_copy(x_bf16))
    assert y_bf16.shape == x_bf16.shape and y_bf16.dtype == x_bf16.dtype
    assert bool(jnp.all(y_bf16 == x_bf16))

    # 3) Pipelined fallback, divisible and awkward shapes.
    y2 = jax.block_until_ready(identity_copy_pipelined(x))
    assert y2.shape == x.shape and y2.dtype == x.dtype
    assert bool(jnp.all(y2 == x))

    y2_odd = jax.block_until_ready(identity_copy_pipelined(x_odd))
    assert y2_odd.shape == x_odd.shape and y2_odd.dtype == x_odd.dtype
    assert bool(jnp.all(y2_odd == x_odd))

    print("KERNEL_OK")
</pallas_src>

<mosaic_0001>
module attributes {stable_mosaic.version = 11 : i64} {
  func.func @_dma_identity_kernel(%arg0: memref<2x4x16x16xf32, #tpu.memory_space<any>>, %arg1: memref<2x4x16x16xf32, #tpu.memory_space<any>>, %arg2: memref<!tpu.dma_semaphore, #tpu.memory_space<semaphore_mem>>) attributes {dimension_semantics = [], scalar_prefetch = 0 : i64, scratch_operands = 1 : i64, tpu.core_type = #tpu.core_type<tc>} {
    tpu.enqueue_dma source(%arg0 : memref<2x4x16x16xf32, #tpu.memory_space<any>>) target(%arg1 : memref<2x4x16x16xf32, #tpu.memory_space<any>>) target_semaphore(%arg2 : memref<!tpu.dma_semaphore, #tpu.memory_space<semaphore_mem>>)
    tpu.wait_dma2 semaphore(%arg2 : memref<!tpu.dma_semaphore, #tpu.memory_space<semaphore_mem>>) src(%arg0 : memref<2x4x16x16xf32, #tpu.memory_space<any>>) dst(%arg1 : memref<2x4x16x16xf32, #tpu.memory_space<any>>)
    return
  }
}

</mosaic_0001>

<llo_original>
// kernel: tpu_custom_call.1
$region0: #{tpu_custom_call.1}
  #allocation0 [shape = 'u32[]', space=smem, size = 0x4, offset = 0x4, fixed_abs, tag = 'smem constant byte address 0x4 - core index']
  #allocation1 [shape = 'u32[144,128]{1,0:T(1,128)}', space=vmem, size = 0x12000, scoped, tag = 'internal scratch']
  #allocation2 [shape = 's32[1]{0}', space=sflag, size = 0x4, scoped, tag = 'scratch operand']
  #allocation3 [shape = 's32[]', space=sflag, size = 0x4, offset = 0, fixed_abs, tag = 'sflag constant byte address 0x0 - dummy sync flag']
  #allocation4 [shape = 'u32[0]{0}', space=smem, size = 0, offset = 0, fixed_abs, tag = 'smem constant byte address 0x0 - null']
  %s0 = inlined_call_operand.hbm [shape: f32[2,4,16,16], index: 0, kind: input, shape index: {}]
  %s1 = inlined_call_operand.hbm [shape: f32[2,4,16,16], index: 1, kind: output, shape index: {}]
  %s2 = sld [smem:[#allocation0]]
  $region2: #{tpu_custom_call.1} parent=0
    _
  %s4 = ssub.s32 1, %s2
  %s5 = scalar_select 0, %s4, %s2
  %s7 = sshll.u32 1, 14
  %s8 = sxor.u32 4294967295, %s7
  %s11 = sshll.u32 3, 24
  %s12 = sxor.u32 4294967295, %s11
  %s13 = sand.u32 0, %s12
  %s15 = sor.u32 %s13, 0
  %18 = dma.general %s0, 2048, %s1, [#allocation2], [#allocation3], [#allocation4], %s15, 0
  %s19 = smul.u32 2, 4
  %s20 = smul.u32 %s19, 16
  %s21 = smul.u32 %s20, 1
  %s22 = sshll.u32 %s21, 4
  %23 = dma.done [#allocation2], %s22
  %24 = vsyncmov [#allocation2]
  %s25 = vpop.sfrf %24
  %p26 = scmp.eq.s32.totalorder %s25, 0
  %p27 = pneg %p26
  %29 = shalt.err (%p27)

</llo_original>
